<compile_context>
chip_gen: v5e
topology: v5e:2x2
jax: 0.10.0
libtpu: 0.0.40
codegen_flags: <defaults>
</compile_context>

<pallas_src>
import math
import functools

import jax
import jax.numpy as jnp
from jax.experimental import pallas as pl
from jax.experimental.pallas import tpu as pltpu

_VMEM_LIMIT = 32 * 1024 * 1024  # safe on v5e(128M)/v6e(128M)/v7x(64M physical)


def _pick_tile(dim, candidates):
    """Largest candidate that evenly divides `dim`, else the full dimension."""
    for c in candidates:
        if dim >= c and dim % c == 0:
            return c
    return dim


def _default_exp_dtype():
    """bf16 exp on chips with a bf16 EUP (v6e/v7x); f32 elsewhere (v5e, older)."""
    try:
        kind = jax.devices()[0].device_kind.lower()
    except Exception:
        return jnp.float32
    if any(tag in kind for tag in ("v2", "v3", "v4", "v5")):
        return jnp.float32
    return jnp.bfloat16


def _attn_tiles(sq, skv, num_heads, d_k, budget_bytes=14 << 20):
    """Pick (tq, tkv) under an explicit VMEM budget (blocks + scratch + temps)."""
    def cands(s):
        c = [t for t in (512, 256, 128) if s % t == 0]
        return c if c else [s]

    def cost(tq, tkv):
        blocks = (num_heads * tq * d_k * 2          # q
                  + 2 * num_heads * tkv * d_k * 2   # k, v
                  + tq * tkv * 2                    # bf16 mask bias
                  + num_heads * tq * d_k * 2)       # out
        scratch = num_heads * tq * (d_k + 2) * 4    # f32 acc + m + l
        interm = num_heads * tq * tkv * 6           # f32 scores + probs
        return 2 * blocks + scratch + interm

    # prefer big tq (cuts K/V HBM re-reads), then big tkv (fewer grid steps)
    for tq in cands(sq):
        for tkv in cands(skv):
            if cost(tq, tkv) <= budget_bytes:
                return tq, tkv
    return cands(sq)[-1], cands(skv)[-1]


# ---------------------------------------------------------------------------
# Kernel 1: fused QKV projection, all head slots in one grid step.
# ---------------------------------------------------------------------------
def _qkv_proj_kernel(x_ref, w_ref, b_ref, o_ref):
    # x_ref: (tm, E)  w_ref: (G, E, Dk)  b_ref: (G, 1, Dk) f32  o_ref: (G, tm, Dk)
    x = x_ref[...]
    num_slots = w_ref.shape[0]
    for g in range(num_slots):  # static unroll; amortizes per-step overhead
        y = jnp.dot(x, w_ref[g], preferred_element_type=jnp.float32)
        o_ref[g] = (y + b_ref[g]).astype(o_ref.dtype)


def pallas_head_projection(x, w, b):
    """x: (B, S, E); w: (G, E, Dk) packed per-head slabs; b: (G, 1, Dk) f32.

    Returns heads-first (G, B, S, Dk) in x.dtype with no transposes.
    """
    B, S, E = x.shape
    G, _, Dk = w.shape
    tm = _pick_tile(S, (512, 256, 128))
    grid = (B, S // tm)
    return pl.pallas_call(
        _qkv_proj_kernel,
        out_shape=jax.ShapeDtypeStruct((G, B, S, Dk), x.dtype),
        grid=grid,
        in_specs=[
            pl.BlockSpec((None, tm, E), lambda bb, i: (bb, i, 0)),
            pl.BlockSpec((G, E, Dk), lambda bb, i: (0, 0, 0)),     # resident weights
            pl.BlockSpec((G, 1, Dk), lambda bb, i: (0, 0, 0)),
        ],
        out_specs=pl.BlockSpec((G, None, tm, Dk), lambda bb, i: (0, bb, i, 0)),
        compiler_params=pltpu.CompilerParams(
            dimension_semantics=("parallel", "parallel"),
            vmem_limit_bytes=_VMEM_LIMIT),
    )(x, w, b)


# ---------------------------------------------------------------------------
# Kernel 2: flash attention, all H heads per grid step (online softmax).
# ---------------------------------------------------------------------------
def _flash_attn_kernel(q_ref, k_ref, v_ref, bias_ref, o_ref,
                       m_scr, l_scr, acc_scr, *, exp_dtype):
    ki = pl.program_id(2)

    @pl.when(ki == 0)
    def _():
        m_scr[...] = jnp.full(m_scr.shape, -jnp.inf, m_scr.dtype)
        l_scr[...] = jnp.zeros_like(l_scr)
        acc_scr[...] = jnp.zeros_like(acc_scr)

    q = q_ref[...]                                   # (H, tq, Dk), pre-scaled
    k = k_ref[...]                                   # (H, tkv, Dk)
    v = v_ref[...]                                   # (H, tkv, Dk)
    bias = bias_ref[...].astype(jnp.float32)         # (tq, tkv), shared by heads

    s = jnp.einsum('hqd,hkd->hqk', q, k,
                   preferred_element_type=jnp.float32)   # (H, tq, tkv)
    s = s + bias                                          # broadcast over heads

    m_prev = m_scr[...]
    m_new = jnp.maximum(m_prev, jnp.max(s, axis=-1, keepdims=True))
    alpha = jnp.exp(m_prev - m_new)
    # exp in bf16 on v6e/v7x (EUP-bound inner loop); f32 on v5e/older.
    p = jnp.exp((s - m_new).astype(exp_dtype))
    l_scr[...] = alpha * l_scr[...] + jnp.sum(
        p.astype(jnp.float32), axis=-1, keepdims=True)
    acc_scr[...] = alpha * acc_scr[...] + jnp.einsum(
        'hqk,hkd->hqd', p.astype(v.dtype), v,
        preferred_element_type=jnp.float32)
    m_scr[...] = m_new

    @pl.when(ki == pl.num_programs(2) - 1)
    def _():
        inv_l = pl.reciprocal(l_scr[...], approx=False)   # off the critical path
        o_ref[...] = (acc_scr[...] * inv_l).astype(o_ref.dtype)


def pallas_flash_attention(q_arr, k_arr, v_arr, bias, *, num_heads,
                           q_blk=0, k_blk=0, v_blk=0,
                           exp_dtype=jnp.float32):
    """Flash attention over heads-first tensors, all heads per grid step.

    q_arr/k_arr/v_arr: (G, B, S, Dk). They may all be the SAME fused
      (3H, B, S, Dk) array; *_blk selects the H-sized head block (0/1/2).
    bias: (B, Sq, Skv) additive mask bias (0 / -1e9), broadcast over heads and
      read only once per (b, qi, ki) tile (no per-head re-read).
    Returns context (H, B, Sq, Dk); p_attn is never materialized.
    """
    _, B, Sq, Dk = q_arr.shape
    Skv = k_arr.shape[2]
    H = num_heads
    tq, tkv = _attn_tiles(Sq, Skv, H, Dk)
    grid = (B, Sq // tq, Skv // tkv)   # reduction (KV) axis last

    kern = functools.partial(_flash_attn_kernel, exp_dtype=exp_dtype)
    return pl.pallas_call(
        kern,
        out_shape=jax.ShapeDtypeStruct((H, B, Sq, Dk), q_arr.dtype),
        grid=grid,
        in_specs=[
            pl.BlockSpec((H, None, tq, Dk), lambda b, qi, ki: (q_blk, b, qi, 0)),
            pl.BlockSpec((H, None, tkv, Dk), lambda b, qi, ki: (k_blk, b, ki, 0)),
            pl.BlockSpec((H, None, tkv, Dk), lambda b, qi, ki: (v_blk, b, ki, 0)),
            pl.BlockSpec((None, tq, tkv), lambda b, qi, ki: (b, qi, ki)),
        ],
        out_specs=pl.BlockSpec((H, None, tq, Dk), lambda b, qi, ki: (0, b, qi, 0)),
        scratch_shapes=[
            pltpu.VMEM((H, tq, 1), jnp.float32),    # running max m
            pltpu.VMEM((H, tq, 1), jnp.float32),    # running denom l
            pltpu.VMEM((H, tq, Dk), jnp.float32),   # f32 output accumulator
        ],
        compiler_params=pltpu.CompilerParams(
            dimension_semantics=("parallel", "parallel", "arbitrary"),
            vmem_limit_bytes=_VMEM_LIMIT),
    )(q_arr, k_arr, v_arr, bias)


# ---------------------------------------------------------------------------
# Kernel 3: output projection, contracting all heads inside one grid step.
# ---------------------------------------------------------------------------
def _out_proj_kernel(ctx_ref, w_ref, b_ref, o_ref):
    # ctx_ref: (H, tm, Dk)  w_ref: (H, Dk, E)  b_ref: (1, E) f32  o_ref: (tm, E)
    H = ctx_ref.shape[0]
    acc = jnp.dot(ctx_ref[0], w_ref[0], preferred_element_type=jnp.float32)
    for h in range(1, H):   # static unroll; full head reduction in one step
        acc = acc + jnp.dot(ctx_ref[h], w_ref[h],
                            preferred_element_type=jnp.float32)
    o_ref[...] = (acc + b_ref[...]).astype(o_ref.dtype)


def pallas_output_projection(ctx, w, b, out_dtype):
    """ctx: (H, B, S, Dk) heads-first; w: (H, Dk, E); b: (1, E) f32 -> (B, S, E)."""
    H, B, S, Dk = ctx.shape
    E = w.shape[-1]
    tm = _pick_tile(S, (512, 256, 128))
    grid = (B, S // tm)
    return pl.pallas_call(
        _out_proj_kernel,
        out_shape=jax.ShapeDtypeStruct((B, S, E), out_dtype),
        grid=grid,
        in_specs=[
            pl.BlockSpec((H, None, tm, Dk), lambda bb, i: (0, bb, i, 0)),
            pl.BlockSpec((H, Dk, E), lambda bb, i: (0, 0, 0)),     # resident weights
            pl.BlockSpec((1, E), lambda bb, i: (0, 0)),
        ],
        out_specs=pl.BlockSpec((None, tm, E), lambda bb, i: (bb, i, 0)),
        compiler_params=pltpu.CompilerParams(
            dimension_semantics=("parallel", "parallel"),
            vmem_limit_bytes=_VMEM_LIMIT),
    )(ctx, w, b)


# ---------------------------------------------------------------------------
# MultiHeadAttention forward (glue in plain JAX, hot paths in Pallas kernels)
# ---------------------------------------------------------------------------
class MultiHeadAttentionPallas:
    def __init__(self, head, embedding_dim, key, compute_dtype=jnp.bfloat16):
        assert embedding_dim % head == 0
        self.head = head
        self.d_k = embedding_dim // head
        self.embedding_dim = embedding_dim
        self.compute_dtype = compute_dtype
        self.exp_dtype = _default_exp_dtype()
        self.attn = None

        E, H, Dk = embedding_dim, head, self.d_k
        ks = jax.random.split(key, 8)
        bound = 1.0 / math.sqrt(E)
        # f32 master weights in PyTorch nn.Linear layout (out_features, in_features).
        self.weights = [jax.random.uniform(ks[2 * i], (E, E), jnp.float32, -bound, bound)
                        for i in range(4)]
        self.biases = [jax.random.uniform(ks[2 * i + 1], (E,), jnp.float32, -bound, bound)
                       for i in range(4)]

        # --- packed kernel weights, precomputed ONCE (not per forward call) ---
        scale = 1.0 / math.sqrt(Dk)
        w_heads, b_heads = [], []
        for i in range(3):
            wh = self.weights[i].T.reshape(E, H, Dk).transpose(1, 0, 2)  # (H, E, Dk)
            bh = self.biases[i].reshape(H, 1, Dk)
            if i == 0:
                # Fold 1/sqrt(Dk) into the f32 Q weights/bias before the bf16 cast.
                wh = wh * scale
                bh = bh * scale
            w_heads.append(wh)
            b_heads.append(bh)
        # Per-projection views (cross-attention path) -- precomputed, no per-call slicing.
        self.w_q, self.w_k, self.w_v = [w.astype(compute_dtype) for w in w_heads]
        self.b_q, self.b_k, self.b_v = [b.astype(jnp.float32) for b in b_heads]
        # Fused QKV pack: (3H, E, Dk); slot i*H + h holds head h of projection i.
        self.w_qkv = jnp.concatenate(w_heads, axis=0).astype(compute_dtype)
        self.b_qkv = jnp.concatenate(b_heads, axis=0).astype(jnp.float32)
        # Output projection as a reduction over heads: (H, Dk, E).
        self.w_out = self.weights[3].T.reshape(H, Dk, E).astype(compute_dtype)
        self.b_out = self.biases[3].reshape(1, E).astype(jnp.float32)

    def __call__(self, query, key, value, mask=None):
        B, Sq, _ = query.shape
        Skv = key.shape[1]
        H = self.head
        cd = self.compute_dtype

        # Additive mask bias. Matches masked_fill(mask==0, -1e9): finite -1e9 is
        # required (do NOT replace with -inf, or fully-masked rows become NaN).
        if mask is not None:
            bias = jnp.where(mask == 0, jnp.float32(-1e9), jnp.float32(0.0)).astype(cd)
        else:
            bias = jnp.zeros((B, Sq, Skv), cd)

        if query is key and key is value:
            # Self-attention: one fused QKV projection, heads-first output.
            qkv = pallas_head_projection(query.astype(cd), self.w_qkv, self.b_qkv)
            ctx = pallas_flash_attention(qkv, qkv, qkv, bias, num_heads=H,
                                         q_blk=0, k_blk=1, v_blk=2,
                                         exp_dtype=self.exp_dtype)
        else:
            qh = pallas_head_projection(query.astype(cd), self.w_q, self.b_q)
            kh = pallas_head_projection(key.astype(cd), self.w_k, self.b_k)
            vh = pallas_head_projection(value.astype(cd), self.w_v, self.b_v)
            ctx = pallas_flash_attention(qh, kh, vh, bias, num_heads=H,
                                         exp_dtype=self.exp_dtype)

        # TODO(synk): p_attn not kept (avoids the B*H*S^2 HBM writeback).
        self.attn = None

        # Final linear consumes heads-first ctx directly; the head merge is the
        # in-kernel reduction over H (no transpose/reshape round trip).
        return pallas_output_projection(ctx, self.w_out, self.b_out, query.dtype)


# ---------------------------------------------------------------------------
# Pure-JAX f32 reference for the correctness check
# ---------------------------------------------------------------------------
def reference_mha(mha, query, key, value, mask):
    B, S, E = query.shape
    H, Dk = mha.head, mha.d_k
    m = mask[:, None, :, :]

    def lin(x, w, b):
        return jnp.einsum("bse,oe->bso", x, w) + b

    q = lin(query, mha.weights[0], mha.biases[0]).reshape(B, S, H, Dk).transpose(0, 2, 1, 3)
    k = lin(key, mha.weights[1], mha.biases[1]).reshape(B, S, H, Dk).transpose(0, 2, 1, 3)
    v = lin(value, mha.weights[2], mha.biases[2]).reshape(B, S, H, Dk).transpose(0, 2, 1, 3)
    scores = jnp.einsum("bhqd,bhkd->bhqk", q, k) / math.sqrt(Dk)
    scores = jnp.where(m == 0, -1e9, scores)
    p = jax.nn.softmax(scores, axis=-1)
    ctx = jnp.einsum("bhqk,bhkd->bhqd", p, v).transpose(0, 2, 1, 3).reshape(B, S, H * Dk)
    return lin(ctx, mha.weights[3], mha.biases[3])


if __name__ == "__main__":
    # small shapes consistent with the module: embedding_dim % head == 0
    B, S, E, H = 2, 8, 32, 4

    root = jax.random.PRNGKey(0)
    k_x, k_m, k_p = jax.random.split(root, 3)

    x = jax.random.normal(k_x, (B, S, E), jnp.float32)
    query = key = value = x                                   # self-attention
    # 0/1 mask (0 => masked, matching masked_fill semantics); keep the diagonal
    # unmasked so every query row attends to at least one key.
    mask = (jax.random.uniform(k_m, (B, S, S)) > 0.3).astype(jnp.float32)
    mask = jnp.maximum(mask, jnp.eye(S, dtype=jnp.float32)[None])

    mha = MultiHeadAttentionPallas(H, E, k_p)

    out = mha(query, key, value, mask=mask)
    out = jax.block_until_ready(out)

    ref = reference_mha(mha, query, key, value, mask)
    assert out.shape == (B, S, E)
    max_err = float(jnp.max(jnp.abs(out - ref)))
    # bf16 MXU inputs => relaxed tolerance vs the f32 reference
    assert jnp.allclose(out, ref, atol=1e-1, rtol=1e-1), f"mismatch vs reference: {max_err}"

    print("KERNEL_OK")
</pallas_src>

<mosaic_0001>
module attributes {stable_mosaic.version = 11 : i64} {
  func.func @_qkv_proj_kernel(%arg0: i32, %arg1: i32, %arg2: memref<1x8x32xbf16, #tpu.memory_space<vmem>>, %arg3: memref<12x32x8xbf16, #tpu.memory_space<vmem>>, %arg4: memref<12x1x8xf32, #tpu.memory_space<vmem>>, %arg5: memref<12x1x8x8xbf16, #tpu.memory_space<vmem>>) attributes {dimension_semantics = [#tpu.dimension_semantics<parallel>, #tpu.dimension_semantics<parallel>], iteration_bounds = array<i64: 2, 1>, scalar_prefetch = 0 : i64, scratch_operands = 0 : i64, tpu.core_type = #tpu.core_type<tc>, window_params = [{transform_indices = @transform_0, window_bounds = array<i64: 1, 8, 32>}, {pipeline_mode = #tpu.pipeline_mode<synchronous>, transform_indices = @transform_1, window_bounds = array<i64: 12, 32, 8>}, {pipeline_mode = #tpu.pipeline_mode<synchronous>, transform_indices = @transform_2, window_bounds = array<i64: 12, 1, 8>}, {transform_indices = @transform_3, window_bounds = array<i64: 12, 1, 8, 8>}]} {
    %c0 = arith.constant 0 : index
    %c0_0 = arith.constant 0 : index
    %c0_1 = arith.constant 0 : index
    %0 = vector.load %arg2[%c0, %c0_0, %c0_1] : memref<1x8x32xbf16, #tpu.memory_space<vmem>>, vector<1x8x32xbf16>
    %1 = vector.shape_cast %0 : vector<1x8x32xbf16> to vector<8x32xbf16>
    %c0_2 = arith.constant 0 : index
    %c0_3 = arith.constant 0 : index
    %c0_4 = arith.constant 0 : index
    %2 = vector.load %arg3[%c0_2, %c0_3, %c0_4] : memref<12x32x8xbf16, #tpu.memory_space<vmem>>, vector<1x32x8xbf16>
    %3 = vector.shape_cast %2 : vector<1x32x8xbf16> to vector<32x8xbf16>
    %cst = arith.constant dense<0.000000e+00> : vector<8x8xf32>
    %4 = tpu.matmul %1, %3, %cst {dimension_numbers = #tpu.dot_dimension_numbers<[1], [0], [0], [1], [0, 0, 1, 1], [], []>} : vector<8x32xbf16>, vector<32x8xbf16>, vector<8x8xf32> -> vector<8x8xf32>
    %c0_5 = arith.constant 0 : index
    %c0_6 = arith.constant 0 : index
    %c0_7 = arith.constant 0 : index
    %5 = vector.load %arg4[%c0_5, %c0_6, %c0_7] : memref<12x1x8xf32, #tpu.memory_space<vmem>>, vector<1x1x8xf32>
    %6 = vector.shape_cast %5 : vector<1x1x8xf32> to vector<1x8xf32>
    %7 = vector.broadcast %6 : vector<1x8xf32> to vector<8x8xf32>
    %8 = arith.addf %4, %7 : vector<8x8xf32>
    %9 = arith.truncf %8 : vector<8x8xf32> to vector<8x8xbf16>
    %c0_8 = arith.constant 0 : index
    %c0_9 = arith.constant 0 : index
    %c0_10 = arith.constant 0 : index
    %c0_11 = arith.constant 0 : index
    %10 = vector.load %arg5[%c0_8, %c0_9, %c0_10, %c0_11] : memref<12x1x8x8xbf16, #tpu.memory_space<vmem>>, vector<1x1x8x8xbf16>
    %11 = vector.shape_cast %10 : vector<1x1x8x8xbf16> to vector<8x8xbf16>
    %12 = vector.shape_cast %9 : vector<8x8xbf16> to vector<1x1x8x8xbf16>
    tpu.vector_store %arg5[%c0_8, %c0_9, %c0_10, %c0_11], %12 {strides = array<i32>} : memref<12x1x8x8xbf16, #tpu.memory_space<vmem>>, vector<1x1x8x8xbf16>,
    %c1 = arith.constant 1 : index
    %c0_12 = arith.constant 0 : index
    %c0_13 = arith.constant 0 : index
    %13 = vector.load %arg3[%c1, %c0_12, %c0_13] : memref<12x32x8xbf16, #tpu.memory_space<vmem>>, vector<1x32x8xbf16>
    %14 = vector.shape_cast %13 : vector<1x32x8xbf16> to vector<32x8xbf16>
    %cst_14 = arith.constant dense<0.000000e+00> : vector<8x8xf32>
    %15 = tpu.matmul %1, %14, %cst_14 {dimension_numbers = #tpu.dot_dimension_numbers<[1], [0], [0], [1], [0, 0, 1, 1], [], []>} : vector<8x32xbf16>, vector<32x8xbf16>, vector<8x8xf32> -> vector<8x8xf32>
    %c1_15 = arith.constant 1 : index
    %c0_16 = arith.constant 0 : index
    %c0_17 = arith.constant 0 : index
    %16 = vector.load %arg4[%c1_15, %c0_16, %c0_17] : memref<12x1x8xf32, #tpu.memory_space<vmem>>, vector<1x1x8xf32>
    %17 = vector.shape_cast %16 : vector<1x1x8xf32> to vector<1x8xf32>
    %18 = vector.broadcast %17 : vector<1x8xf32> to vector<8x8xf32>
    %19 = arith.addf %15, %18 : vector<8x8xf32>
    %20 = arith.truncf %19 : vector<8x8xf32> to vector<8x8xbf16>
    %c1_18 = arith.constant 1 : index
    %c0_19 = arith.constant 0 : index
    %c0_20 = arith.constant 0 : index
    %c0_21 = arith.constant 0 : index
    %21 = vector.load %arg5[%c1_18, %c0_19, %c0_20, %c0_21] : memref<12x1x8x8xbf16, #tpu.memory_space<vmem>>, vector<1x1x8x8xbf16>
    %22 = vector.shape_cast %21 : vector<1x1x8x8xbf16> to vector<8x8xbf16>
    %23 = vector.shape_cast %20 : vector<8x8xbf16> to vector<1x1x8x8xbf16>
    tpu.vector_store %arg5[%c1_18, %c0_19, %c0_20, %c0_21], %23 {strides = array<i32>} : memref<12x1x8x8xbf16, #tpu.memory_space<vmem>>, vector<1x1x8x8xbf16>,
    %c2 = arith.constant 2 : index
    %c0_22 = arith.constant 0 : index
    %c0_23 = arith.constant 0 : index
    %24 = vector.load %arg3[%c2, %c0_22, %c0_23] : memref<12x32x8xbf16, #tpu.memory_space<vmem>>, vector<1x32x8xbf16>
    %25 = vector.shape_cast %24 : vector<1x32x8xbf16> to vector<32x8xbf16>
    %cst_24 = arith.constant dense<0.000000e+00> : vector<8x8xf32>
    %26 = tpu.matmul %1, %25, %cst_24 {dimension_numbers = #tpu.dot_dimension_numbers<[1], [0], [0], [1], [0, 0, 1, 1], [], []>} : vector<8x32xbf16>, vector<32x8xbf16>, vector<8x8xf32> -> vector<8x8xf32>
    %c2_25 = arith.constant 2 : index
    %c0_26 = arith.constant 0 : index
    %c0_27 = arith.constant 0 : index
    %27 = vector.load %arg4[%c2_25, %c0_26, %c0_27] : memref<12x1x8xf32, #tpu.memory_space<vmem>>, vector<1x1x8xf32>
    %28 = vector.shape_cast %27 : vector<1x1x8xf32> to vector<1x8xf32>
    %29 = vector.broadcast %28 : vector<1x8xf32> to vector<8x8xf32>
    %30 = arith.addf %26, %29 : vector<8x8xf32>
    %31 = arith.truncf %30 : vector<8x8xf32> to vector<8x8xbf16>
    %c2_28 = arith.constant 2 : index
    %c0_29 = arith.constant 0 : index
    %c0_30 = arith.constant 0 : index
    %c0_31 = arith.constant 0 : index
    %32 = vector.load %arg5[%c2_28, %c0_29, %c0_30, %c0_31] : memref<12x1x8x8xbf16, #tpu.memory_space<vmem>>, vector<1x1x8x8xbf16>
    %33 = vector.shape_cast %32 : vector<1x1x8x8xbf16> to vector<8x8xbf16>
    %34 = vector.shape_cast %31 : vector<8x8xbf16> to vector<1x1x8x8xbf16>
    tpu.vector_store %arg5[%c2_28, %c0_29, %c0_30, %c0_31], %34 {strides = array<i32>} : memref<12x1x8x8xbf16, #tpu.memory_space<vmem>>, vector<1x1x8x8xbf16>,
    %c3 = arith.constant 3 : index
    %c0_32 = arith.constant 0 : index
    %c0_33 = arith.constant 0 : index
    %35 = vector.load %arg3[%c3, %c0_32, %c0_33] : memref<12x32x8xbf16, #tpu.memory_space<vmem>>, vector<1x32x8xbf16>
    %36 = vector.shape_cast %35 : vector<1x32x8xbf16> to vector<32x8xbf16>
    %cst_34 = arith.constant dense<0.000000e+00> : vector<8x8xf32>
    %37 = tpu.matmul %1, %36, %cst_34 {dimension_numbers = #tpu.dot_dimension_numbers<[1], [0], [0], [1], [0, 0, 1, 1], [], []>} : vector<8x32xbf16>, vector<32x8xbf16>, vector<8x8xf32> -> vector<8x8xf32>
    %c3_35 = arith.constant 3 : index
    %c0_36 = arith.constant 0 : index
    %c0_37 = arith.constant 0 : index
    %38 = vector.load %arg4[%c3_35, %c0_36, %c0_37] : memref<12x1x8xf32, #tpu.memory_space<vmem>>, vector<1x1x8xf32>
    %39 = vector.shape_cast %38 : vector<1x1x8xf32> to vector<1x8xf32>
    %40 = vector.broadcast %39 : vector<1x8xf32> to vector<8x8xf32>
    %41 = arith.addf %37, %40 : vector<8x8xf32>
    %42 = arith.truncf %41 : vector<8x8xf32> to vector<8x8xbf16>
    %c3_38 = arith.constant 3 : index
    %c0_39 = arith.constant 0 : index
    %c0_40 = arith.constant 0 : index
    %c0_41 = arith.constant 0 : index
    %43 = vector.load %arg5[%c3_38, %c0_39, %c0_40, %c0_41] : memref<12x1x8x8xbf16, #tpu.memory_space<vmem>>, vector<1x1x8x8xbf16>
    %44 = vector.shape_cast %43 : vector<1x1x8x8xbf16> to vector<8x8xbf16>
    %45 = vector.shape_cast %42 : vector<8x8xbf16> to vector<1x1x8x8xbf16>
    tpu.vector_store %arg5[%c3_38, %c0_39, %c0_40, %c0_41], %45 {strides = array<i32>} : memref<12x1x8x8xbf16, #tpu.memory_space<vmem>>, vector<1x1x8x8xbf16>,
    %c4 = arith.constant 4 : index
    %c0_42 = arith.constant 0 : index
    %c0_43 = arith.constant 0 : index
    %46 = vector.load %arg3[%c4, %c0_42, %c0_43] : memref<12x32x8xbf16, #tpu.memory_space<vmem>>, vector<1x32x8xbf16>
    %47 = vector.shape_cast %46 : vector<1x32x8xbf16> to vector<32x8xbf16>
    %cst_44 = arith.constant dense<0.000000e+00> : vector<8x8xf32>
    %48 = tpu.matmul %1, %47, %cst_44 {dimension_numbers = #tpu.dot_dimension_numbers<[1], [0], [0], [1], [0, 0, 1, 1], [], []>} : vector<8x32xbf16>, vector<32x8xbf16>, vector<8x8xf32> -> vector<8x8xf32>
    %c4_45 = arith.constant 4 : index
    %c0_46 = arith.constant 0 : index
    %c0_47 = arith.constant 0 : index
    %49 = vector.load %arg4[%c4_45, %c0_46, %c0_47] : memref<12x1x8xf32, #tpu.memory_space<vmem>>, vector<1x1x8xf32>
    %50 = vector.shape_cast %49 : vector<1x1x8xf32> to vector<1x8xf32>
    %51 = vector.broadcast %50 : vector<1x8xf32> to vector<8x8xf32>
    %52 = arith.addf %48, %51 : vector<8x8xf32>
    %53 = arith.truncf %52 : vector<8x8xf32> to vector<8x8xbf16>
    %c4_48 = arith.constant 4 : index
    %c0_49 = arith.constant 0 : index
    %c0_50 = arith.constant 0 : index
    %c0_51 = arith.constant 0 : index
    %54 = vector.load %arg5[%c4_48, %c0_49, %c0_50, %c0_51] : memref<12x1x8x8xbf16, #tpu.memory_space<vmem>>, vector<1x1x8x8xbf16>
    %55 = vector.shape_cast %54 : vector<1x1x8x8xbf16> to vector<8x8xbf16>
    %56 = vector.shape_cast %53 : vector<8x8xbf16> to vector<1x1x8x8xbf16>
    tpu.vector_store %arg5[%c4_48, %c0_49, %c0_50, %c0_51], %56 {strides = array<i32>} : memref<12x1x8x8xbf16, #tpu.memory_space<vmem>>, vector<1x1x8x8xbf16>,
    %c5 = arith.constant 5 : index
    %c0_52 = arith.constant 0 : index
    %c0_53 = arith.constant 0 : index
    %57 = vector.load %arg3[%c5, %c0_52, %c0_53] : memref<12x32x8xbf16, #tpu.memory_space<vmem>>, vector<1x32x8xbf16>
    %58 = vector.shape_cast %57 : vector<1x32x8xbf16> to vector<32x8xbf16>
    %cst_54 = arith.constant dense<0.000000e+00> : vector<8x8xf32>
    %59 = tpu.matmul %1, %58, %cst_54 {dimension_numbers = #tpu.dot_dimension_numbers<[1], [0], [0], [1], [0, 0, 1, 1], [], []>} : vector<8x32xbf16>, vector<32x8xbf16>, vector<8x8xf32> -> vector<8x8xf32>
    %c5_55 = arith.constant 5 : index
    %c0_56 = arith.constant 0 : index
    %c0_57 = arith.constant 0 : index
    %60 = vector.load %arg4[%c5_55, %c0_56, %c0_57] : memref<12x1x8xf32, #tpu.memory_space<vmem>>, vector<1x1x8xf32>
    %61 = vector.shape_cast %60 : vector<1x1x8xf32> to vector<1x8xf32>
    %62 = vector.broadcast %61 : vector<1x8xf32> to vector<8x8xf32>
    %63 = arith.addf %59, %62 : vector<8x8xf32>
    %64 = arith.truncf %63 : vector<8x8xf32> to vector<8x8xbf16>
    %c5_58 = arith.constant 5 : index
    %c0_59 = arith.constant 0 : index
    %c0_60 = arith.constant 0 : index
    %c0_61 = arith.constant 0 : index
    %65 = vector.load %arg5[%c5_58, %c0_59, %c0_60, %c0_61] : memref<12x1x8x8xbf16, #tpu.memory_space<vmem>>, vector<1x1x8x8xbf16>
    %66 = vector.shape_cast %65 : vector<1x1x8x8xbf16> to vector<8x8xbf16>
    %67 = vector.shape_cast %64 : vector<8x8xbf16> to vector<1x1x8x8xbf16>
    tpu.vector_store %arg5[%c5_58, %c0_59, %c0_60, %c0_61], %67 {strides = array<i32>} : memref<12x1x8x8xbf16, #tpu.memory_space<vmem>>, vector<1x1x8x8xbf16>,
    %c6 = arith.constant 6 : index
    %c0_62 = arith.constant 0 : index
    %c0_63 = arith.constant 0 : index
    %68 = vector.load %arg3[%c6, %c0_62, %c0_63] : memref<12x32x8xbf16, #tpu.memory_space<vmem>>, vector<1x32x8xbf16>
    %69 = vector.shape_cast %68 : vector<1x32x8xbf16> to vector<32x8xbf16>
    %cst_64 = arith.constant dense<0.000000e+00> : vector<8x8xf32>
    %70 = tpu.matmul %1, %69, %cst_64 {dimension_numbers = #tpu.dot_dimension_numbers<[1], [0], [0], [1], [0, 0, 1, 1], [], []>} : vector<8x32xbf16>, vector<32x8xbf16>, vector<8x8xf32> -> vector<8x8xf32>
    %c6_65 = arith.constant 6 : index
    %c0_66 = arith.constant 0 : index
    %c0_67 = arith.constant 0 : index
    %71 = vector.load %arg4[%c6_65, %c0_66, %c0_67] : memref<12x1x8xf32, #tpu.memory_space<vmem>>, vector<1x1x8xf32>
    %72 = vector.shape_cast %71 : vector<1x1x8xf32> to vector<1x8xf32>
    %73 = vector.broadcast %72 : vector<1x8xf32> to vector<8x8xf32>
    %74 = arith.addf %70, %73 : vector<8x8xf32>
    %75 = arith.truncf %74 : vector<8x8xf32> to vector<8x8xbf16>
    %c6_68 = arith.constant 6 : index
    %c0_69 = arith.constant 0 : index
    %c0_70 = arith.constant 0 : index
    %c0_71 = arith.constant 0 : index
    %76 = vector.load %arg5[%c6_68, %c0_69, %c0_70, %c0_71] : memref<12x1x8x8xbf16, #tpu.memory_space<vmem>>, vector<1x1x8x8xbf16>
    %77 = vector.shape_cast %76 : vector<1x1x8x8xbf16> to vector<8x8xbf16>
    %78 = vector.shape_cast %75 : vector<8x8xbf16> to vector<1x1x8x8xbf16>
    tpu.vector_store %arg5[%c6_68, %c0_69, %c0_70, %c0_71], %78 {strides = array<i32>} : memref<12x1x8x8xbf16, #tpu.memory_space<vmem>>, vector<1x1x8x8xbf16>,
    %c7 = arith.constant 7 : index
    %c0_72 = arith.constant 0 : index
    %c0_73 = arith.constant 0 : index
    %79 = vector.load %arg3[%c7, %c0_72, %c0_73] : memref<12x32x8xbf16, #tpu.memory_space<vmem>>, vector<1x32x8xbf16>
    %80 = vector.shape_cast %79 : vector<1x32x8xbf16> to vector<32x8xbf16>
    %cst_74 = arith.constant dense<0.000000e+00> : vector<8x8xf32>
    %81 = tpu.matmul %1, %80, %cst_74 {dimension_numbers = #tpu.dot_dimension_numbers<[1], [0], [0], [1], [0, 0, 1, 1], [], []>} : vector<8x32xbf16>, vector<32x8xbf16>, vector<8x8xf32> -> vector<8x8xf32>
    %c7_75 = arith.constant 7 : index
    %c0_76 = arith.constant 0 : index
    %c0_77 = arith.constant 0 : index
    %82 = vector.load %arg4[%c7_75, %c0_76, %c0_77] : memref<12x1x8xf32, #tpu.memory_space<vmem>>, vector<1x1x8xf32>
    %83 = vector.shape_cast %82 : vector<1x1x8xf32> to vector<1x8xf32>
    %84 = vector.broadcast %83 : vector<1x8xf32> to vector<8x8xf32>
    %85 = arith.addf %81, %84 : vector<8x8xf32>
    %86 = arith.truncf %85 : vector<8x8xf32> to vector<8x8xbf16>
    %c7_78 = arith.constant 7 : index
    %c0_79 = arith.constant 0 : index
    %c0_80 = arith.constant 0 : index
    %c0_81 = arith.constant 0 : index
    %87 = vector.load %arg5[%c7_78, %c0_79, %c0_80, %c0_81] : memref<12x1x8x8xbf16, #tpu.memory_space<vmem>>, vector<1x1x8x8xbf16>
    %88 = vector.shape_cast %87 : vector<1x1x8x8xbf16> to vector<8x8xbf16>
    %89 = vector.shape_cast %86 : vector<8x8xbf16> to vector<1x1x8x8xbf16>
    tpu.vector_store %arg5[%c7_78, %c0_79, %c0_80, %c0_81], %89 {strides = array<i32>} : memref<12x1x8x8xbf16, #tpu.memory_space<vmem>>, vector<1x1x8x8xbf16>,
    %c8 = arith.constant 8 : index
    %c0_82 = arith.constant 0 : index
    %c0_83 = arith.constant 0 : index
    %90 = vector.load %arg3[%c8, %c0_82, %c0_83] : memref<12x32x8xbf16, #tpu.memory_space<vmem>>, vector<1x32x8xbf16>
    %91 = vector.shape_cast %90 : vector<1x32x8xbf16> to vector<32x8xbf16>
    %cst_84 = arith.constant dense<0.000000e+00> : vector<8x8xf32>
    %92 = tpu.matmul %1, %91, %cst_84 {dimension_numbers = #tpu.dot_dimension_numbers<[1], [0], [0], [1], [0, 0, 1, 1], [], []>} : vector<8x32xbf16>, vector<32x8xbf16>, vector<8x8xf32> -> vector<8x8xf32>
    %c8_85 = arith.constant 8 : index
    %c0_86 = arith.constant 0 : index
    %c0_87 = arith.constant 0 : index
    %93 = vector.load %arg4[%c8_85, %c0_86, %c0_87] : memref<12x1x8xf32, #tpu.memory_space<vmem>>, vector<1x1x8xf32>
    %94 = vector.shape_cast %93 : vector<1x1x8xf32> to vector<1x8xf32>
    %95 = vector.broadcast %94 : vector<1x8xf32> to vector<8x8xf32>
    %96 = arith.addf %92, %95 : vector<8x8xf32>
    %97 = arith.truncf %96 : vector<8x8xf32> to vector<8x8xbf16>
    %c8_88 = arith.constant 8 : index
    %c0_89 = arith.constant 0 : index
    %c0_90 = arith.constant 0 : index
    %c0_91 = arith.constant 0 : index
    %98 = vector.load %arg5[%c8_88, %c0_89, %c0_90, %c0_91] : memref<12x1x8x8xbf16, #tpu.memory_space<vmem>>, vector<1x1x8x8xbf16>
    %99 = vector.shape_cast %98 : vector<1x1x8x8xbf16> to vector<8x8xbf16>
    %100 = vector.shape_cast %97 : vector<8x8xbf16> to vector<1x1x8x8xbf16>
    tpu.vector_store %arg5[%c8_88, %c0_89, %c0_90, %c0_91], %100 {strides = array<i32>} : memref<12x1x8x8xbf16, #tpu.memory_space<vmem>>, vector<1x1x8x8xbf16>,
    %c9 = arith.constant 9 : index
    %c0_92 = arith.constant 0 : index
    %c0_93 = arith.constant 0 : index
    %101 = vector.load %arg3[%c9, %c0_92, %c0_93] : memref<12x32x8xbf16, #tpu.memory_space<vmem>>, vector<1x32x8xbf16>
    %102 = vector.shape_cast %101 : vector<1x32x8xbf16> to vector<32x8xbf16>
    %cst_94 = arith.constant dense<0.000000e+00> : vector<8x8xf32>
    %103 = tpu.matmul %1, %102, %cst_94 {dimension_numbers = #tpu.dot_dimension_numbers<[1], [0], [0], [1], [0, 0, 1, 1], [], []>} : vector<8x32xbf16>, vector<32x8xbf16>, vector<8x8xf32> -> vector<8x8xf32>
    %c9_95 = arith.constant 9 : index
    %c0_96 = arith.constant 0 : index
    %c0_97 = arith.constant 0 : index
    %104 = vector.load %arg4[%c9_95, %c0_96, %c0_97] : memref<12x1x8xf32, #tpu.memory_space<vmem>>, vector<1x1x8xf32>
    %105 = vector.shape_cast %104 : vector<1x1x8xf32> to vector<1x8xf32>
    %106 = vector.broadcast %105 : vector<1x8xf32> to vector<8x8xf32>
    %107 = arith.addf %103, %106 : vector<8x8xf32>
    %108 = arith.truncf %107 : vector<8x8xf32> to vector<8x8xbf16>
    %c9_98 = arith.constant 9 : index
    %c0_99 = arith.constant 0 : index
    %c0_100 = arith.constant 0 : index
    %c0_101 = arith.constant 0 : index
    %109 = vector.load %arg5[%c9_98, %c0_99, %c0_100, %c0_101] : memref<12x1x8x8xbf16, #tpu.memory_space<vmem>>, vector<1x1x8x8xbf16>
    %110 = vector.shape_cast %109 : vector<1x1x8x8xbf16> to vector<8x8xbf16>
    %111 = vector.shape_cast %108 : vector<8x8xbf16> to vector<1x1x8x8xbf16>
    tpu.vector_store %arg5[%c9_98, %c0_99, %c0_100, %c0_101], %111 {strides = array<i32>} : memref<12x1x8x8xbf16, #tpu.memory_space<vmem>>, vector<1x1x8x8xbf16>,
    %c10 = arith.constant 10 : index
    %c0_102 = arith.constant 0 : index
    %c0_103 = arith.constant 0 : index
    %112 = vector.load %arg3[%c10, %c0_102, %c0_103] : memref<12x32x8xbf16, #tpu.memory_space<vmem>>, vector<1x32x8xbf16>
    %113 = vector.shape_cast %112 : vector<1x32x8xbf16> to vector<32x8xbf16>
    %cst_104 = arith.constant dense<0.000000e+00> : vector<8x8xf32>
    %114 = tpu.matmul %1, %113, %cst_104 {dimension_numbers = #tpu.dot_dimension_numbers<[1], [0], [0], [1], [0, 0, 1, 1], [], []>} : vector<8x32xbf16>, vector<32x8xbf16>, vector<8x8xf32> -> vector<8x8xf32>
    %c10_105 = arith.constant 10 : index
    %c0_106 = arith.constant 0 : index
    %c0_107 = arith.constant 0 : index
    %115 = vector.load %arg4[%c10_105, %c0_106, %c0_107] : memref<12x1x8xf32, #tpu.memory_space<vmem>>, vector<1x1x8xf32>
    %116 = vector.shape_cast %115 : vector<1x1x8xf32> to vector<1x8xf32>
    %117 = vector.broadcast %116 : vector<1x8xf32> to vector<8x8xf32>
    %118 = arith.addf %114, %117 : vector<8x8xf32>
    %119 = arith.truncf %118 : vector<8x8xf32> to vector<8x8xbf16>
    %c10_108 = arith.constant 10 : index
    %c0_109 = arith.constant 0 : index
    %c0_110 = arith.constant 0 : index
    %c0_111 = arith.constant 0 : index
    %120 = vector.load %arg5[%c10_108, %c0_109, %c0_110, %c0_111] : memref<12x1x8x8xbf16, #tpu.memory_space<vmem>>, vector<1x1x8x8xbf16>
    %121 = vector.shape_cast %120 : vector<1x1x8x8xbf16> to vector<8x8xbf16>
    %122 = vector.shape_cast %119 : vector<8x8xbf16> to vector<1x1x8x8xbf16>
    tpu.vector_store %arg5[%c10_108, %c0_109, %c0_110, %c0_111], %122 {strides = array<i32>} : memref<12x1x8x8xbf16, #tpu.memory_space<vmem>>, vector<1x1x8x8xbf16>,
    %c11 = arith.constant 11 : index
    %c0_112 = arith.constant 0 : index
    %c0_113 = arith.constant 0 : index
    %123 = vector.load %arg3[%c11, %c0_112, %c0_113] : memref<12x32x8xbf16, #tpu.memory_space<vmem>>, vector<1x32x8xbf16>
    %124 = vector.shape_cast %123 : vector<1x32x8xbf16> to vector<32x8xbf16>
    %cst_114 = arith.constant dense<0.000000e+00> : vector<8x8xf32>
    %125 = tpu.matmul %1, %124, %cst_114 {dimension_numbers = #tpu.dot_dimension_numbers<[1], [0], [0], [1], [0, 0, 1, 1], [], []>} : vector<8x32xbf16>, vector<32x8xbf16>, vector<8x8xf32> -> vector<8x8xf32>
    %c11_115 = arith.constant 11 : index
    %c0_116 = arith.constant 0 : index
    %c0_117 = arith.constant 0 : index
    %126 = vector.load %arg4[%c11_115, %c0_116, %c0_117] : memref<12x1x8xf32, #tpu.memory_space<vmem>>, vector<1x1x8xf32>
    %127 = vector.shape_cast %126 : vector<1x1x8xf32> to vector<1x8xf32>
    %128 = vector.broadcast %127 : vector<1x8xf32> to vector<8x8xf32>
    %129 = arith.addf %125, %128 : vector<8x8xf32>
    %130 = arith.truncf %129 : vector<8x8xf32> to vector<8x8xbf16>
    %c11_118 = arith.constant 11 : index
    %c0_119 = arith.constant 0 : index
    %c0_120 = arith.constant 0 : index
    %c0_121 = arith.constant 0 : index
    %131 = vector.load %arg5[%c11_118, %c0_119, %c0_120, %c0_121] : memref<12x1x8x8xbf16, #tpu.memory_space<vmem>>, vector<1x1x8x8xbf16>
    %132 = vector.shape_cast %131 : vector<1x1x8x8xbf16> to vector<8x8xbf16>
    %133 = vector.shape_cast %130 : vector<8x8xbf16> to vector<1x1x8x8xbf16>
    tpu.vector_store %arg5[%c11_118, %c0_119, %c0_120, %c0_121], %133 {strides = array<i32>} : memref<12x1x8x8xbf16, #tpu.memory_space<vmem>>, vector<1x1x8x8xbf16>,
    return
  }
  func.func @transform_0(%arg0: i32, %arg1: i32) -> (i32, i32, i32) {
    %c0_i32 = arith.constant 0 : i32
    %c0_i32_0 = arith.constant 0 : i32
    return %arg0, %arg1, %c0_i32 : i32, i32, i32
  }
  func.func @transform_1(%arg0: i32, %arg1: i32) -> (i32, i32, i32) {
    %c0_i32 = arith.constant 0 : i32
    %c0_i32_0 = arith.constant 0 : i32
    %c0_i32_1 = arith.constant 0 : i32
    %c0_i32_2 = arith.constant 0 : i32
    return %c0_i32, %c0_i32_0, %c0_i32_1 : i32, i32, i32
  }
  func.func @transform_2(%arg0: i32, %arg1: i32) -> (i32, i32, i32) {
    %c0_i32 = arith.constant 0 : i32
    %c0_i32_0 = arith.constant 0 : i32
    %c0_i32_1 = arith.constant 0 : i32
    %c0_i32_2 = arith.constant 0 : i32
    return %c0_i32, %c0_i32_0, %c0_i32_1 : i32, i32, i32
  }
  func.func @transform_3(%arg0: i32, %arg1: i32) -> (i32, i32, i32, i32) {
    %c0_i32 = arith.constant 0 : i32
    %c0_i32_0 = arith.constant 0 : i32
    %c0_i32_1 = arith.constant 0 : i32
    return %c0_i32, %arg0, %arg1, %c0_i32_0 : i32, i32, i32, i32
  }
}

</mosaic_0001>

<llo_original>
// kernel: tpu_custom_call.1
$region0: #{tpu_custom_call.1}
  #allocation0 [shape = 'u32[]', space=smem, size = 0x4, offset = 0x4, fixed_abs, tag = 'smem constant byte address 0x4 - core index']
  #allocation1 [shape = 'u32[72,128]{1,0:T(1,128)}', space=vmem, size = 0x9000, scoped, tag = 'internal scratch']
  %s0 = inlined_call_operand.vmem [shape: bf16[2,8,32], index: 0, kind: input, shape index: {}]
  %s1 = inlined_call_operand.vmem [shape: bf16[12,32,8], index: 1, kind: input, shape index: {}]
  %s2 = inlined_call_operand.vmem [shape: f32[12,1,8], index: 2, kind: input, shape index: {}]
  %s3 = inlined_call_operand.vmem [shape: bf16[12,2,8,8], index: 3, kind: output, shape index: {}]
  %s4 = sld [smem:[#allocation0]]
  $region82: #{tpu_custom_call.1} parent=0
    _
  %s6 = ssub.s32 1, %s4
  %s7 = scalar_select 0, %s6, %s4
  $region1: #{tpu_custom_call.1} parent=0
    #allocation2 [shape = 'u8[49152]{0}', space=vmem, size = 0xc000, scoped, tag = 'output window, operand 0']
    loop: start=0, step=1, limit=4
    $region2: #{tpu_custom_call.1} parent=1 // loop_pre_header
      _
    $region3: #{tpu_custom_call.1} parent=1 // loop_header
      %s9 = sphi 0, %s13
      %p10 = scmp.ge.s32.totalorder %s9, 4
      %s16 = sphi 0, %s28
      %s17 = sphi 0, %s24
      %s18 = sphi 0, %s16
      %s19 = sphi 0, %s17
      %s20 = sphi 0, %s18
      %s21 = sphi 0, %s19
      %s33 = sphi 0, %s35
      %s36 = sphi 0, %s33
      %s37 = sphi 0, %s36
      %s53 = sphi 0, %s37
      %s57 = sphi 0, %s57
      %s59 = sphi 0, %s57
      %s60 = sphi 0, %s59
      %s74 = sphi 0, %s60
      %s78 = sphi 0, %s78
      %s80 = sphi 0, %s78
      %s81 = sphi 0, %s80
      %s95 = sphi 0, %s81
      %s103 = sphi 0, %s105
      %s106 = sphi 0, %s103
      %s107 = sphi 0, %s106
      %s123 = sphi 0, %s107
    $region4: #{tpu_custom_call.1} parent=1 // loop_header_branch
      %12 = sbr.rel (%p10) target = $region8
    $region5: #{tpu_custom_call.1} parent=1 // loop_body
      %s14 = ssub.s32 %s9, 1
      %s15 = ssub.s32 %s9, 2
      %s22 = sadd.s32 1, %s17
      %p23 = scmp.ge.s32.totalorder %s22, 1
      %s24 = scalar_select %p23, 0, %s22
      %s25 = sadd.s32 1, %s16
      %s26 = scalar_select %p23, %s25, %s16
      %p27 = scmp.ge.s32.totalorder %s26, 2
      %s28 = scalar_select %p27, 0, %s26
      %s29 = ssub.s32 %s16, %s28
      %s30 = ssub.s32 %s17, %s24
      %s31 = sor.u32 %s29, %s30
      %p32 = scmp.eq.s32.totalorder %s31, 0
      %s34 = sadd.s32 %s33, 1
      %s35 = scalar_select %p32, %s33, %s34
      %p38 = pneg %p32
      %p39 = scmp.eq.s32.totalorder %s9, 1
      %p40 = por %p38, %p39
      %p41 = scmp.ne.s32.totalorder %s33, %s36
      %p42 = scmp.eq.s32.totalorder %s9, 0
      %p43 = por %p41, %p42
      %p44 = scmp.ne.s32.totalorder %s33, %s36
      %p45 = scmp.eq.s32.totalorder %s14, 1
      %p46 = por %p44, %p45
      %p47 = scmp.ne.s32.totalorder %s36, %s37
      %p48 = scmp.eq.s32.totalorder %s14, 0
      %p49 = por %p47, %p48
      %p50 = scmp.ne.s32.totalorder %s36, %s37
      %p51 = scmp.eq.s32.totalorder %s15, 1
      %p52 = por %p50, %p51
      %p54 = scmp.ne.s32.totalorder %s37, %s53
      %p55 = scmp.eq.s32.totalorder %s15, 0
      %p56 = por %p54, %p55
      %s58 = sadd.s32 %s57, 1
      %p61 = scmp.eq.s32.totalorder %s9, 1
      %p62 = scmp.ne.s32.totalorder %s57, %s59
      %p63 = scmp.eq.s32.totalorder %s9, 0
      %p64 = por %p62, %p63
      %p65 = scmp.ne.s32.totalorder %s57, %s59
      %p66 = scmp.eq.s32.totalorder %s14, 1
      %p67 = por %p65, %p66
      %p68 = scmp.ne.s32.totalorder %s59, %s60
      %p69 = scmp.eq.s32.totalorder %s14, 0
      %p70 = por %p68, %p69
      %p71 = scmp.ne.s32.totalorder %s59, %s60
      %p72 = scmp.eq.s32.totalorder %s15, 1
      %p73 = por %p71, %p72
      %p75 = scmp.ne.s32.totalorder %s60, %s74
      %p76 = scmp.eq.s32.totalorder %s15, 0
      %p77 = por %p75, %p76
      %s79 = sadd.s32 %s78, 1
      %p82 = scmp.eq.s32.totalorder %s9, 1
      %p83 = scmp.ne.s32.totalorder %s78, %s80
      %p84 = scmp.eq.s32.totalorder %s9, 0
      %p85 = por %p83, %p84
      %p86 = scmp.ne.s32.totalorder %s78, %s80
      %p87 = scmp.eq.s32.totalorder %s14, 1
      %p88 = por %p86, %p87
      %p89 = scmp.ne.s32.totalorder %s80, %s81
      %p90 = scmp.eq.s32.totalorder %s14, 0
      %p91 = por %p89, %p90
      %p92 = scmp.ne.s32.totalorder %s80, %s81
      %p93 = scmp.eq.s32.totalorder %s15, 1
      %p94 = por %p92, %p93
      %p96 = scmp.ne.s32.totalorder %s81, %s95
      %p97 = scmp.eq.s32.totalorder %s15, 0
      %p98 = por %p96, %p97
      %s99 = ssub.s32 %s16, %s28
      %s100 = ssub.s32 %s17, %s24
      %s101 = sor.u32 %s99, %s100
      %p102 = scmp.eq.s32.totalorder %s101, 0
      %s104 = sadd.s32 %s103, 1
      %s105 = scalar_select %p102, %s103, %s104
      %p108 = pneg %p102
      %p109 = scmp.eq.s32.totalorder %s9, 1
      %p110 = por %p108, %p109
      %p111 = scmp.ne.s32.totalorder %s103, %s106
      %p112 = scmp.eq.s32.totalorder %s9, 0
      %p113 = por %p111, %p112
      %p114 = scmp.ne.s32.totalorder %s103, %s106
      %p115 = scmp.eq.s32.totalorder %s14, 1
      %p116 = por %p114, %p115
      %p117 = scmp.ne.s32.totalorder %s106, %s107
      %p118 = scmp.eq.s32.totalorder %s14, 0
      %p119 = por %p117, %p118
      %p120 = scmp.ne.s32.totalorder %s106, %s107
      %p121 = scmp.eq.s32.totalorder %s15, 1
      %p122 = por %p120, %p121
      %p124 = scmp.ne.s32.totalorder %s107, %s123
      %p125 = scmp.eq.s32.totalorder %s15, 0
      %p126 = por %p124, %p125
      %p127 = scmp.le.s32.totalorder 1, %s9
      %p128 = scmp.lt.s32.totalorder %s9, 3
      %p129 = pnand %p127, %p128
      %p130 = pneg %p129
      // Predicated region
      $region9: #{tpu_custom_call.1} parent=5 // pred_check
        _
      $region10: #{tpu_custom_call.1} parent=5 // pred_check_branch
        %132 = sbr.rel (%p129) target = $region12
      $region11: #{tpu_custom_call.1} parent=5 // pred_region
        %s133 = ssub.s32 %s9, 1
        // Predicated region
        $region13: #{tpu_custom_call.1} parent=11 // pred_check
          %p134 = pneg %p70
        $region14: #{tpu_custom_call.1} parent=11 // pred_check_branch
          %136 = sbr.rel (%p134) target = $region16
        $region15: #{tpu_custom_call.1} parent=11 // pred_region
          _
        $region16: #{tpu_custom_call.1} parent=11 // pred_fallthru
          _
        // Predicated region
        $region17: #{tpu_custom_call.1} parent=11 // pred_check
          %p137 = pneg %p91
        $region18: #{tpu_custom_call.1} parent=11 // pred_check_branch
          %139 = sbr.rel (%p137) target = $region20
        $region19: #{tpu_custom_call.1} parent=11 // pred_region
          _
        $region20: #{tpu_custom_call.1} parent=11 // pred_fallthru
          _
      $region12: #{tpu_custom_call.1} parent=5 // pred_fallthru
        _
      %p140 = scmp.lt.s32.totalorder %s9, 2
      // Predicated region
      $region21: #{tpu_custom_call.1} parent=5 // pred_check
        %p141 = pneg %p140
      $region22: #{tpu_custom_call.1} parent=5 // pred_check_branch
        %143 = sbr.rel (%p141) target = $region24
      $region23: #{tpu_custom_call.1} parent=5 // pred_region
        // Predicated region
        $region25: #{tpu_custom_call.1} parent=23 // pred_check
          %p144 = pneg %p43
        $region26: #{tpu_custom_call.1} parent=23 // pred_check_branch
          %146 = sbr.rel (%p144) target = $region28
        $region27: #{tpu_custom_call.1} parent=23 // pred_region
          %p147 = scmp.lt.s32.totalorder %s16, 1
          %s148 = scalar_select %p147, %s16, 1
          %p149 = scmp.lt.s32.totalorder %s17, 0
          %s150 = scalar_select %p149, %s17, 0
          %s151 = sadd.s32 %s150, %s148
          %s152 = smul.addr %s151, 4
          %s153 = scalar_lea.vmem %s0, %s152
        $region28: #{tpu_custom_call.1} parent=23 // pred_fallthru
          _
      $region24: #{tpu_custom_call.1} parent=5 // pred_fallthru
        _
      %p154 = scmp.le.s32.totalorder 1, %s9
      %p155 = scmp.lt.s32.totalorder %s9, 3
      %p156 = pnand %p154, %p155
      %p157 = pneg %p156
      // Predicated region
      $region29: #{tpu_custom_call.1} parent=5 // pred_check
        _
      $region30: #{tpu_custom_call.1} parent=5 // pred_check_branch
        %159 = sbr.rel (%p156) target = $region32
      $region31: #{tpu_custom_call.1} parent=5 // pred_region
        %s160 = ssub.s32 %s9, 1
        %p161 = scmp.lt.s32.totalorder %s18, 1
        %s162 = scalar_select %p161, %s18, 1
        %p163 = scmp.lt.s32.totalorder %s19, 0
        %s164 = scalar_select %p163, %s19, 0
        %s165 = sadd.s32 %s164, %s162
        %s166 = smul.addr %s165, 4
        %s167 = scalar_lea.vmem %s0, %s166
        %p168 = pneg %p49
        %p169 = pneg %p46
        %p170 = pneg %p70
        %p171 = pneg %p67
        %p172 = pneg %p91
        %p173 = pneg %p88
        %p174 = pneg %p119
        %p175 = pneg %p116
        %s176 = sand.u32 %s106, 1
        %s177 = sand.u32 %s106, 1
        %s178 = smul.addr %s177, 48
        %s179 = scalar_lea.vmem [#allocation2], %s178
        %p180 = scmp.lt.s32.totalorder %s18, 1
        %s181 = scalar_select %p180, %s18, 1
        %p182 = scmp.lt.s32.totalorder %s19, 0
        %s183 = scalar_select %p182, %s19, 0
        %s184 = sadd.s32 %s183, %s181
        %s185 = smul.addr %s184, 4
        %s186 = scalar_lea.vmem %s0, %s185
        %v188 = vld [vmem:[%s186] sm:$0xf]
        %v189 = vld [vmem:[%s1] sm:$0xf]
        %v190 = vld [vmem:[%s1 + $0x4] sm:$0xf]
        %v191 = vld [vmem:[%s1 + $0x8] sm:$0xf]
        %v192 = vld [vmem:[%s1 + $0xc] sm:$0xf]
        %v193 = vld [vmem:[%s2] sm:$0x1]
        %v195 = vperm.slane %v193, 0
        %v201 = vunpack.c.l.b16 %v189
        %v202 = vunpack.c.l.b16 %v190
        %v203 = vunpack.c.l.b16 %v191
        %v204 = vunpack.c.l.b16 %v192
        %v205 = vpack.c.b16 %v202, %v201
        %v206 = vpack.c.b16 %v204, %v203
        %vm209 = vcmask 261120
        %v211 = vsel %vm209, %v188, 0
        %213 = vmatpush.bf16.msra.mxu0 0
        %214 = vmatpush.bf16.msra.mxu0 0
        %215 = vmatpush.bf16.msra.mxu0 0
        %216 = vmatpush.bf16.msra.mxu0 0
        %217 = vmatpush.bf16.msra.mxu0 0
        %218 = vmatpush.bf16.msra.mxu0 0
        %219 = vmatpush.bf16.msra.mxu0 %v206
        %220 = vmatpush.bf16.msra.mxu0 %v205
        %221 = vmatmul.bf16.gmra.mxu0 %v211
        %v222 = vpop.f32.mrf.mxu0
        %v223 = vadd.f32 %v195, %v222
        %v224 = vpop.f32.mrf.mxu0
        %225 = vdwg.mxu0
        %v226 = vpack.c.bf16 %v223, %v223
        %vm227 = vcmask 60416
        %228 = vst.msk [vmem:[%s179] sm:$0xf] %vm227, %v226
        %s229 = scalar_lea.vmem %s1, 16
        %v230 = vld [vmem:[%s229] sm:$0xf]
        %v231 = vld [vmem:[%s229 + $0x4] sm:$0xf]
        %v232 = vld [vmem:[%s229 + $0x8] sm:$0xf]
        %v233 = vld [vmem:[%s229 + $0xc] sm:$0xf]
        %s234 = scalar_lea.vmem %s2, 1
        %v235 = vld [vmem:[%s234] sm:$0x1]
        %v237 = vperm.slane %v235, 0
        %v243 = vunpack.c.l.b16 %v230
        %v244 = vunpack.c.l.b16 %v231
        %v245 = vunpack.c.l.b16 %v232
        %v246 = vunpack.c.l.b16 %v233
        %v247 = vpack.c.b16 %v244, %v243
        %v248 = vpack.c.b16 %v246, %v245
        %251 = vmatpush.bf16.msra.mxu0 0
        %252 = vmatpush.bf16.msra.mxu0 0
        %253 = vmatpush.bf16.msra.mxu0 0
        %254 = vmatpush.bf16.msra.mxu0 0
        %255 = vmatpush.bf16.msra.mxu0 0
        %256 = vmatpush.bf16.msra.mxu0 0
        %257 = vmatpush.bf16.msra.mxu0 %v248
        %258 = vmatpush.bf16.msra.mxu0 %v247
        %259 = vmatmul.bf16.gmra.mxu0 %v211
        %v260 = vpop.f32.mrf.mxu0
        %v261 = vadd.f32 %v237, %v260
        %v262 = vpop.f32.mrf.mxu0
        %263 = vdwg.mxu0
        %v264 = vpack.c.bf16 %v261, %v261
        %s265 = scalar_lea.vmem %s179, 4 [#allocation2]
        %266 = vst.msk [vmem:[%s265] sm:$0xf] %vm227, %v264
        %s267 = scalar_lea.vmem %s1, 32
        %v268 = vld [vmem:[%s267] sm:$0xf]
        %v269 = vld [vmem:[%s267 + $0x4] sm:$0xf]
        %v270 = vld [vmem:[%s267 + $0x8] sm:$0xf]
        %v271 = vld [vmem:[%s267 + $0xc] sm:$0xf]
        %s272 = scalar_lea.vmem %s2, 2
        %v273 = vld [vmem:[%s272] sm:$0x1]
        %v275 = vperm.slane %v273, 0
        %v281 = vunpack.c.l.b16 %v268
        %v282 = vunpack.c.l.b16 %v269
        %v283 = vunpack.c.l.b16 %v270
        %v284 = vunpack.c.l.b16 %v271
        %v285 = vpack.c.b16 %v282, %v281
        %v286 = vpack.c.b16 %v284, %v283
        %289 = vmatpush.bf16.msra.mxu0 0
        %290 = vmatpush.bf16.msra.mxu0 0
        %291 = vmatpush.bf16.msra.mxu0 0
        %292 = vmatpush.bf16.msra.mxu0 0
        %293 = vmatpush.bf16.msra.mxu0 0
        %294 = vmatpush.bf16.msra.mxu0 0
        %295 = vmatpush.bf16.msra.mxu0 %v286
        %296 = vmatpush.bf16.msra.mxu0 %v285
        %297 = vmatmul.bf16.gmra.mxu0 %v211
        %v298 = vpop.f32.mrf.mxu0
        %v299 = vadd.f32 %v275, %v298
        %v300 = vpop.f32.mrf.mxu0
        %301 = vdwg.mxu0
        %v302 = vpack.c.bf16 %v299, %v299
        %s303 = scalar_lea.vmem %s179, 8 [#allocation2]
        %304 = vst.msk [vmem:[%s303] sm:$0xf] %vm227, %v302
        %s305 = scalar_lea.vmem %s1, 48
        %v306 = vld [vmem:[%s305] sm:$0xf]
        %v307 = vld [vmem:[%s305 + $0x4] sm:$0xf]
        %v308 = vld [vmem:[%s305 + $0x8] sm:$0xf]
        %v309 = vld [vmem:[%s305 + $0xc] sm:$0xf]
        %s310 = scalar_lea.vmem %s2, 3
        %v311 = vld [vmem:[%s310] sm:$0x1]
        %v313 = vperm.slane %v311, 0
        %v319 = vunpack.c.l.b16 %v306
        %v320 = vunpack.c.l.b16 %v307
        %v321 = vunpack.c.l.b16 %v308
        %v322 = vunpack.c.l.b16 %v309
        %v323 = vpack.c.b16 %v320, %v319
        %v324 = vpack.c.b16 %v322, %v321
        %327 = vmatpush.bf16.msra.mxu0 0
        %328 = vmatpush.bf16.msra.mxu0 0
        %329 = vmatpush.bf16.msra.mxu0 0
        %330 = vmatpush.bf16.msra.mxu0 0
        %331 = vmatpush.bf16.msra.mxu0 0
        %332 = vmatpush.bf16.msra.mxu0 0
        %333 = vmatpush.bf16.msra.mxu0 %v324
        %334 = vmatpush.bf16.msra.mxu0 %v323
        %335 = vmatmul.bf16.gmra.mxu0 %v211
        %v336 = vpop.f32.mrf.mxu0
        %v337 = vadd.f32 %v313, %v336
        %v338 = vpop.f32.mrf.mxu0
        %339 = vdwg.mxu0
        %v340 = vpack.c.bf16 %v337, %v337
        %s341 = scalar_lea.vmem %s179, 12 [#allocation2]
        %342 = vst.msk [vmem:[%s341] sm:$0xf] %vm227, %v340
        %s343 = scalar_lea.vmem %s1, 64
        %v344 = vld [vmem:[%s343] sm:$0xf]
        %v345 = vld [vmem:[%s343 + $0x4] sm:$0xf]
        %v346 = vld [vmem:[%s343 + $0x8] sm:$0xf]
        %v347 = vld [vmem:[%s343 + $0xc] sm:$0xf]
        %s348 = scalar_lea.vmem %s2, 4
        %v349 = vld [vmem:[%s348] sm:$0x1]
        %v351 = vperm.slane %v349, 0
        %v357 = vunpack.c.l.b16 %v344
        %v358 = vunpack.c.l.b16 %v345
        %v359 = vunpack.c.l.b16 %v346
        %v360 = vunpack.c.l.b16 %v347
        %v361 = vpack.c.b16 %v358, %v357
        %v362 = vpack.c.b16 %v360, %v359
        %365 = vmatpush.bf16.msra.mxu0 0
        %366 = vmatpush.bf16.msra.mxu0 0
        %367 = vmatpush.bf16.msra.mxu0 0
        %368 = vmatpush.bf16.msra.mxu0 0
        %369 = vmatpush.bf16.msra.mxu0 0
        %370 = vmatpush.bf16.msra.mxu0 0
        %371 = vmatpush.bf16.msra.mxu0 %v362
        %372 = vmatpush.bf16.msra.mxu0 %v361
        %373 = vmatmul.bf16.gmra.mxu0 %v211
        %v374 = vpop.f32.mrf.mxu0
        %v375 = vadd.f32 %v351, %v374
        %v376 = vpop.f32.mrf.mxu0
        %377 = vdwg.mxu0
        %v378 = vpack.c.bf16 %v375, %v375
        %s379 = scalar_lea.vmem %s179, 16 [#allocation2]
        %380 = vst.msk [vmem:[%s379] sm:$0xf] %vm227, %v378
        %s381 = scalar_lea.vmem %s1, 80
        %v382 = vld [vmem:[%s381] sm:$0xf]
        %v383 = vld [vmem:[%s381 + $0x4] sm:$0xf]
        %v384 = vld [vmem:[%s381 + $0x8] sm:$0xf]
        %v385 = vld [vmem:[%s381 + $0xc] sm:$0xf]
        %s386 = scalar_lea.vmem %s2, 5
        %v387 = vld [vmem:[%s386] sm:$0x1]
        %v389 = vperm.slane %v387, 0
        %v395 = vunpack.c.l.b16 %v382
        %v396 = vunpack.c.l.b16 %v383
        %v397 = vunpack.c.l.b16 %v384
        %v398 = vunpack.c.l.b16 %v385
        %v399 = vpack.c.b16 %v396, %v395
        %v400 = vpack.c.b16 %v398, %v397
        %403 = vmatpush.bf16.msra.mxu0 0
        %404 = vmatpush.bf16.msra.mxu0 0
        %405 = vmatpush.bf16.msra.mxu0 0
        %406 = vmatpush.bf16.msra.mxu0 0
        %407 = vmatpush.bf16.msra.mxu0 0
        %408 = vmatpush.bf16.msra.mxu0 0
        %409 = vmatpush.bf16.msra.mxu0 %v400
        %410 = vmatpush.bf16.msra.mxu0 %v399
        %411 = vmatmul.bf16.gmra.mxu0 %v211
        %v412 = vpop.f32.mrf.mxu0
        %v413 = vadd.f32 %v389, %v412
        %v414 = vpop.f32.mrf.mxu0
        %415 = vdwg.mxu0
        %v416 = vpack.c.bf16 %v413, %v413
        %s417 = scalar_lea.vmem %s179, 20 [#allocation2]
        %418 = vst.msk [vmem:[%s417] sm:$0xf] %vm227, %v416
        %s419 = scalar_lea.vmem %s1, 96
        %v420 = vld [vmem:[%s419] sm:$0xf]
        %v421 = vld [vmem:[%s419 + $0x4] sm:$0xf]
        %v422 = vld [vmem:[%s419 + $0x8] sm:$0xf]
        %v423 = vld [vmem:[%s419 + $0xc] sm:$0xf]
        %s424 = scalar_lea.vmem %s2, 6
        %v425 = vld [vmem:[%s424] sm:$0x1]
        %v427 = vperm.slane %v425, 0
        %v433 = vunpack.c.l.b16 %v420
        %v434 = vunpack.c.l.b16 %v421
        %v435 = vunpack.c.l.b16 %v422
        %v436 = vunpack.c.l.b16 %v423
        %v437 = vpack.c.b16 %v434, %v433
        %v438 = vpack.c.b16 %v436, %v435
        %441 = vmatpush.bf16.msra.mxu0 0
        %442 = vmatpush.bf16.msra.mxu0 0
        %443 = vmatpush.bf16.msra.mxu0 0
        %444 = vmatpush.bf16.msra.mxu0 0
        %445 = vmatpush.bf16.msra.mxu0 0
        %446 = vmatpush.bf16.msra.mxu0 0
        %447 = vmatpush.bf16.msra.mxu0 %v438
        %448 = vmatpush.bf16.msra.mxu0 %v437
        %449 = vmatmul.bf16.gmra.mxu0 %v211
        %v450 = vpop.f32.mrf.mxu0
        %v451 = vadd.f32 %v427, %v450
        %v452 = vpop.f32.mrf.mxu0
        %453 = vdwg.mxu0
        %v454 = vpack.c.bf16 %v451, %v451
        %s455 = scalar_lea.vmem %s179, 24 [#allocation2]
        %456 = vst.msk [vmem:[%s455] sm:$0xf] %vm227, %v454
        %s457 = scalar_lea.vmem %s1, 112
        %v458 = vld [vmem:[%s457] sm:$0xf]
        %v459 = vld [vmem:[%s457 + $0x4] sm:$0xf]
        %v460 = vld [vmem:[%s457 + $0x8] sm:$0xf]
        %v461 = vld [vmem:[%s457 + $0xc] sm:$0xf]
        %s462 = scalar_lea.vmem %s2, 7
        %v463 = vld [vmem:[%s462] sm:$0x1]
        %v465 = vperm.slane %v463, 0
        %v471 = vunpack.c.l.b16 %v458
        %v472 = vunpack.c.l.b16 %v459
        %v473 = vunpack.c.l.b16 %v460
        %v474 = vunpack.c.l.b16 %v461
        %v475 = vpack.c.b16 %v472, %v471
        %v476 = vpack.c.b16 %v474, %v473
        %479 = vmatpush.bf16.msra.mxu0 0
        %480 = vmatpush.bf16.msra.mxu0 0
        %481 = vmatpush.bf16.msra.mxu0 0
        %482 = vmatpush.bf16.msra.mxu0 0
        %483 = vmatpush.bf16.msra.mxu0 0
        %484 = vmatpush.bf16.msra.mxu0 0
        %485 = vmatpush.bf16.msra.mxu0 %v476
        %486 = vmatpush.bf16.msra.mxu0 %v475
        %487 = vmatmul.bf16.gmra.mxu0 %v211
        %v488 = vpop.f32.mrf.mxu0
        %v489 = vadd.f32 %v465, %v488
        %v490 = vpop.f32.mrf.mxu0
        %491 = vdwg.mxu0
        %v492 = vpack.c.bf16 %v489, %v489
        %s493 = scalar_lea.vmem %s179, 28 [#allocation2]
        %494 = vst.msk [vmem:[%s493] sm:$0xf] %vm227, %v492
        %s495 = scalar_lea.vmem %s1, 128
        %v496 = vld [vmem:[%s495] sm:$0xf]
        %v497 = vld [vmem:[%s495 + $0x4] sm:$0xf]
        %v498 = vld [vmem:[%s495 + $0x8] sm:$0xf]
        %v499 = vld [vmem:[%s495 + $0xc] sm:$0xf]
        %s500 = scalar_lea.vmem %s2, 8
        %v501 = vld [vmem:[%s500] sm:$0x1]
        %v503 = vperm.slane %v501, 0
        %v509 = vunpack.c.l.b16 %v496
        %v510 = vunpack.c.l.b16 %v497
        %v511 = vunpack.c.l.b16 %v498
        %v512 = vunpack.c.l.b16 %v499
        %v513 = vpack.c.b16 %v510, %v509
        %v514 = vpack.c.b16 %v512, %v511
        %517 = vmatpush.bf16.msra.mxu0 0
        %518 = vmatpush.bf16.msra.mxu0 0
        %519 = vmatpush.bf16.msra.mxu0 0
        %520 = vmatpush.bf16.msra.mxu0 0
        %521 = vmatpush.bf16.msra.mxu0 0
        %522 = vmatpush.bf16.msra.mxu0 0
        %523 = vmatpush.bf16.msra.mxu0 %v514
        %524 = vmatpush.bf16.msra.mxu0 %v513
        %525 = vmatmul.bf16.gmra.mxu0 %v211
        %v526 = vpop.f32.mrf.mxu0
        %v527 = vadd.f32 %v503, %v526
        %v528 = vpop.f32.mrf.mxu0
        %529 = vdwg.mxu0
        %v530 = vpack.c.bf16 %v527, %v527
        %s531 = scalar_lea.vmem %s179, 32 [#allocation2]
        %532 = vst.msk [vmem:[%s531] sm:$0xf] %vm227, %v530
        %s533 = scalar_lea.vmem %s1, 144
        %v534 = vld [vmem:[%s533] sm:$0xf]
        %v535 = vld [vmem:[%s533 + $0x4] sm:$0xf]
        %v536 = vld [vmem:[%s533 + $0x8] sm:$0xf]
        %v537 = vld [vmem:[%s533 + $0xc] sm:$0xf]
        %s538 = scalar_lea.vmem %s2, 9
        %v539 = vld [vmem:[%s538] sm:$0x1]
        %v541 = vperm.slane %v539, 0
        %v547 = vunpack.c.l.b16 %v534
        %v548 = vunpack.c.l.b16 %v535
        %v549 = vunpack.c.l.b16 %v536
        %v550 = vunpack.c.l.b16 %v537
        %v551 = vpack.c.b16 %v548, %v547
        %v552 = vpack.c.b16 %v550, %v549
        %555 = vmatpush.bf16.msra.mxu0 0
        %556 = vmatpush.bf16.msra.mxu0 0
        %557 = vmatpush.bf16.msra.mxu0 0
        %558 = vmatpush.bf16.msra.mxu0 0
        %559 = vmatpush.bf16.msra.mxu0 0
        %560 = vmatpush.bf16.msra.mxu0 0
        %561 = vmatpush.bf16.msra.mxu0 %v552
        %562 = vmatpush.bf16.msra.mxu0 %v551
        %563 = vmatmul.bf16.gmra.mxu0 %v211
        %v564 = vpop.f32.mrf.mxu0
        %v565 = vadd.f32 %v541, %v564
        %v566 = vpop.f32.mrf.mxu0
        %567 = vdwg.mxu0
        %v568 = vpack.c.bf16 %v565, %v565
        %s569 = scalar_lea.vmem %s179, 36 [#allocation2]
        %570 = vst.msk [vmem:[%s569] sm:$0xf] %vm227, %v568
        %s571 = scalar_lea.vmem %s1, 160
        %v572 = vld [vmem:[%s571] sm:$0xf]
        %v573 = vld [vmem:[%s571 + $0x4] sm:$0xf]
        %v574 = vld [vmem:[%s571 + $0x8] sm:$0xf]
        %v575 = vld [vmem:[%s571 + $0xc] sm:$0xf]
        %s576 = scalar_lea.vmem %s2, 10
        %v577 = vld [vmem:[%s576] sm:$0x1]
        %v579 = vperm.slane %v577, 0
        %v585 = vunpack.c.l.b16 %v572
        %v586 = vunpack.c.l.b16 %v573
        %v587 = vunpack.c.l.b16 %v574
        %v588 = vunpack.c.l.b16 %v575
        %v589 = vpack.c.b16 %v586, %v585
        %v590 = vpack.c.b16 %v588, %v587
        %593 = vmatpush.bf16.msra.mxu0 0
        %594 = vmatpush.bf16.msra.mxu0 0
        %595 = vmatpush.bf16.msra.mxu0 0
        %596 = vmatpush.bf16.msra.mxu0 0
        %597 = vmatpush.bf16.msra.mxu0 0
        %598 = vmatpush.bf16.msra.mxu0 0
        %599 = vmatpush.bf16.msra.mxu0 %v590
        %600 = vmatpush.bf16.msra.mxu0 %v589
        %601 = vmatmul.bf16.gmra.mxu0 %v211
        %v602 = vpop.f32.mrf.mxu0
        %v603 = vadd.f32 %v579, %v602
        %v604 = vpop.f32.mrf.mxu0
        %605 = vdwg.mxu0
        %v606 = vpack.c.bf16 %v603, %v603
        %s607 = scalar_lea.vmem %s179, 40 [#allocation2]
        %608 = vst.msk [vmem:[%s607] sm:$0xf] %vm227, %v606
        %s609 = scalar_lea.vmem %s1, 176
        %v610 = vld [vmem:[%s609] sm:$0xf]
        %v611 = vld [vmem:[%s609 + $0x4] sm:$0xf]
        %v612 = vld [vmem:[%s609 + $0x8] sm:$0xf]
        %v613 = vld [vmem:[%s609 + $0xc] sm:$0xf]
        %s614 = scalar_lea.vmem %s2, 11
        %v615 = vld [vmem:[%s614] sm:$0x1]
        %v617 = vperm.slane %v615, 0
        %v623 = vunpack.c.l.b16 %v610
        %v624 = vunpack.c.l.b16 %v611
        %v625 = vunpack.c.l.b16 %v612
        %v626 = vunpack.c.l.b16 %v613
        %v627 = vpack.c.b16 %v624, %v623
        %v628 = vpack.c.b16 %v626, %v625
        %631 = vmatpush.bf16.msra.mxu0 0
        %632 = vmatpush.bf16.msra.mxu0 0
        %633 = vmatpush.bf16.msra.mxu0 0
        %634 = vmatpush.bf16.msra.mxu0 0
        %635 = vmatpush.bf16.msra.mxu0 0
        %636 = vmatpush.bf16.msra.mxu0 0
        %637 = vmatpush.bf16.msra.mxu0 %v628
        %638 = vmatpush.bf16.msra.mxu0 %v627
        %639 = vmatmul.bf16.gmra.mxu0 %v211
        %v640 = vpop.f32.mrf.mxu0
        %v641 = vadd.f32 %v617, %v640
        %v642 = vpop.f32.mrf.mxu0
        %643 = vdwg.mxu0
        %v644 = vpack.c.bf16 %v641, %v641
        %s645 = scalar_lea.vmem %s179, 44 [#allocation2]
        %646 = vst.msk [vmem:[%s645] sm:$0xf] %vm227, %v644
        %s647 = sand.u32 %s106, 1
        %s648 = sand.u32 %s106, 1
        %s649 = smul.addr %s648, 48
        %s650 = scalar_lea.vmem [#allocation2], %s649
        // Predicated region
        $region33: #{tpu_custom_call.1} parent=31 // pred_check
          %p651 = pneg %p116
        $region34: #{tpu_custom_call.1} parent=31 // pred_check_branch
          %653 = sbr.rel (%p651) target = $region36
        $region35: #{tpu_custom_call.1} parent=31 // pred_region
          %s654 = sadd.s32 %s19, %s18
          %s655 = smul.addr %s654, 4
          %s656 = scalar_lea.vmem %s3, %s655
          // Predicated region
          $region37: #{tpu_custom_call.1} parent=35 // pred_check
            _
          $region38: #{tpu_custom_call.1} parent=35 // pred_check_branch
            %658 = sbr.rel (0) target = $region40
          $region39: #{tpu_custom_call.1} parent=35 // pred_region
            // Predicated region
            $region41: #{tpu_custom_call.1} parent=39 // pred_check
              _
            $region42: #{tpu_custom_call.1} parent=39 // pred_check_branch
              %660 = sbr.rel target = $region44
            $region43: #{tpu_custom_call.1} parent=39 // pred_region
              // Predicated region
              $region56: #{tpu_custom_call.1} parent=43 // pred_check
                _
              $region57: #{tpu_custom_call.1} parent=43 // pred_check_branch
                %698 = sbr.rel (0) target = $region59
              $region58: #{tpu_custom_call.1} parent=43 // pred_region
                loop: start=0, step=1, limit=1
                $region60: #{tpu_custom_call.1} parent=58 // loop_pre_header
                  _
                $region61: #{tpu_custom_call.1} parent=58 // loop_header
                  %s700 = sphi 0, %s704
                  %p701 = scmp.ge.s32.totalorder %s700, 1
                  %s705 = sphi %s650, %s650
                  %s706 = sphi %s656, %s656
                $region62: #{tpu_custom_call.1} parent=58 // loop_header_branch
                  %703 = sbr.rel (%p701) target = $region66
                $region63: #{tpu_custom_call.1} parent=58 // loop_body
                  _
                $region64: #{tpu_custom_call.1} parent=58 // loop_footer
                  %s704 = sadd.s32 1, %s700
                $region65: #{tpu_custom_call.1} parent=58 // loop_footer_branch
                  %699 = sbr.rel target = $region61
                $region66: #{tpu_custom_call.1} parent=58 // loop_exit
                  _
                %s708 = ssub.s32 16, 1
                loop: start=0, step=1, limit=1
                $region67: #{tpu_custom_call.1} parent=58 // loop_pre_header
                  _
                $region68: #{tpu_custom_call.1} parent=58 // loop_header
                  %s710 = sphi 0, %s714
                  %p711 = scmp.ge.s32.totalorder %s710, 1
                  %s715 = sphi %s650, %s650
                  %s716 = sphi %s656, %s656
                $region69: #{tpu_custom_call.1} parent=58 // loop_header_branch
                  %713 = sbr.rel (%p711) target = $region73
                $region70: #{tpu_custom_call.1} parent=58 // loop_body
                  %v717 = vld [vmem:[%s715] sm:%s708]
                  %718 = vst [vmem:[%s716] sm:%s708] %v717
                  %v719 = vld [vmem:[%s715 + $0x4] sm:%s708]
                  %720 = vst [vmem:[%s716 + $0x8] sm:%s708] %v719
                  %v721 = vld [vmem:[%s715 + $0x8] sm:%s708]
                  %722 = vst [vmem:[%s716 + $0x10] sm:%s708] %v721
                  %v723 = vld [vmem:[%s715 + $0xc] sm:%s708]
                  %724 = vst [vmem:[%s716 + $0x18] sm:%s708] %v723
                  %v725 = vld [vmem:[%s715 + $0x10] sm:%s708]
                  %726 = vst [vmem:[%s716 + $0x20] sm:%s708] %v725
                  %v727 = vld [vmem:[%s715 + $0x14] sm:%s708]
                  %728 = vst [vmem:[%s716 + $0x28] sm:%s708] %v727
                  %v729 = vld [vmem:[%s715 + $0x18] sm:%s708]
                  %730 = vst [vmem:[%s716 + $0x30] sm:%s708] %v729
                  %v731 = vld [vmem:[%s715 + $0x1c] sm:%s708]
                  %732 = vst [vmem:[%s716 + $0x38] sm:%s708] %v731
                  %v733 = vld [vmem:[%s715 + $0x20] sm:%s708]
                  %734 = vst [vmem:[%s716 + $0x40] sm:%s708] %v733
                  %v735 = vld [vmem:[%s715 + $0x24] sm:%s708]
                  %736 = vst [vmem:[%s716 + $0x48] sm:%s708] %v735
                  %v737 = vld [vmem:[%s715 + $0x28] sm:%s708]
                  %738 = vst [vmem:[%s716 + $0x50] sm:%s708] %v737
                  %v739 = vld [vmem:[%s715 + $0x2c] sm:%s708]
                  %740 = vst [vmem:[%s716 + $0x58] sm:%s708] %v739
                $region71: #{tpu_custom_call.1} parent=58 // loop_footer
                  %s714 = sadd.s32 1, %s710
                $region72: #{tpu_custom_call.1} parent=58 // loop_footer_branch
                  %709 = sbr.rel target = $region68
                $region73: #{tpu_custom_call.1} parent=58 // loop_exit
                  _
              $region59: #{tpu_custom_call.1} parent=43 // pred_fallthru
                _
            $region44: #{tpu_custom_call.1} parent=39 // pred_fallthru
              _
            // Predicated region
            $region45: #{tpu_custom_call.1} parent=39 // pred_check
              _
            $region46: #{tpu_custom_call.1} parent=39 // pred_check_branch
              %662 = sbr.rel (0) target = $region48
            $region47: #{tpu_custom_call.1} parent=39 // pred_region
              %s664 = ssub.s32 16, 1
              loop: start=0, step=1, limit=1
              $region49: #{tpu_custom_call.1} parent=47 // loop_pre_header
                _
              $region50: #{tpu_custom_call.1} parent=47 // loop_header
                %s666 = sphi 0, %s670
                %p667 = scmp.ge.s32.totalorder %s666, 1
                %s671 = sphi %s650, %s650
                %s672 = sphi %s656, %s656
              $region51: #{tpu_custom_call.1} parent=47 // loop_header_branch
                %669 = sbr.rel (%p667) target = $region55
              $region52: #{tpu_custom_call.1} parent=47 // loop_body
                %v673 = vld [vmem:[%s671] sm:%s664]
                %674 = vst [vmem:[%s672] sm:%s664] %v673
                %v675 = vld [vmem:[%s671 + $0x4] sm:%s664]
                %676 = vst [vmem:[%s672 + $0x8] sm:%s664] %v675
                %v677 = vld [vmem:[%s671 + $0x8] sm:%s664]
                %678 = vst [vmem:[%s672 + $0x10] sm:%s664] %v677
                %v679 = vld [vmem:[%s671 + $0xc] sm:%s664]
                %680 = vst [vmem:[%s672 + $0x18] sm:%s664] %v679
                %v681 = vld [vmem:[%s671 + $0x10] sm:%s664]
                %682 = vst [vmem:[%s672 + $0x20] sm:%s664] %v681
                %v683 = vld [vmem:[%s671 + $0x14] sm:%s664]
                %684 = vst [vmem:[%s672 + $0x28] sm:%s664] %v683
                %v685 = vld [vmem:[%s671 + $0x18] sm:%s664]
                %686 = vst [vmem:[%s672 + $0x30] sm:%s664] %v685
                %v687 = vld [vmem:[%s671 + $0x1c] sm:%s664]
                %688 = vst [vmem:[%s672 + $0x38] sm:%s664] %v687
                %v689 = vld [vmem:[%s671 + $0x20] sm:%s664]
                %690 = vst [vmem:[%s672 + $0x40] sm:%s664] %v689
                %v691 = vld [vmem:[%s671 + $0x24] sm:%s664]
                %692 = vst [vmem:[%s672 + $0x48] sm:%s664] %v691
                %v693 = vld [vmem:[%s671 + $0x28] sm:%s664]
                %694 = vst [vmem:[%s672 + $0x50] sm:%s664] %v693
                %v695 = vld [vmem:[%s671 + $0x2c] sm:%s664]
                %696 = vst [vmem:[%s672 + $0x58] sm:%s664] %v695
              $region53: #{tpu_custom_call.1} parent=47 // loop_footer
                %s670 = sadd.s32 1, %s666
              $region54: #{tpu_custom_call.1} parent=47 // loop_footer_branch
                %665 = sbr.rel target = $region50
              $region55: #{tpu_custom_call.1} parent=47 // loop_exit
                _
            $region48: #{tpu_custom_call.1} parent=39 // pred_fallthru
              _
          $region40: #{tpu_custom_call.1} parent=35 // pred_fallthru
            _
          %741 = vnop
        $region36: #{tpu_custom_call.1} parent=31 // pred_fallthru
          _
      $region32: #{tpu_custom_call.1} parent=5 // pred_fallthru
        _
      %p742 = scmp.le.s32.totalorder 2, %s9
      // Predicated region
      $region74: #{tpu_custom_call.1} parent=5 // pred_check
        %p743 = pneg %p742
      $region75: #{tpu_custom_call.1} parent=5 // pred_check_branch
        %745 = sbr.rel (%p743) target = $region77
      $region76: #{tpu_custom_call.1} parent=5 // pred_region
        %s746 = ssub.s32 %s9, 2
        // Predicated region
        $region78: #{tpu_custom_call.1} parent=76 // pred_check
          %p747 = pneg %p122
        $region79: #{tpu_custom_call.1} parent=76 // pred_check_branch
          %749 = sbr.rel (%p747) target = $region81
        $region80: #{tpu_custom_call.1} parent=76 // pred_region
          %s750 = sand.u32 %s107, 1
          %s751 = sand.u32 %s107, 1
          %s752 = smul.addr %s751, 48
          %s753 = scalar_lea.vmem [#allocation2], %s752
        $region81: #{tpu_custom_call.1} parent=76 // pred_fallthru
          _
      $region77: #{tpu_custom_call.1} parent=5 // pred_fallthru
        _
    $region6: #{tpu_custom_call.1} parent=1 // loop_footer
      %s13 = sadd.s32 1, %s9
    $region7: #{tpu_custom_call.1} parent=1 // loop_footer_branch
      %8 = sbr.rel target = $region3
    $region8: #{tpu_custom_call.1} parent=1 // loop_exit
      _

</llo_original>
